<compile_context>
chip_gen: v6e
topology: v6e:2x2x1
jax: 0.10.0
libtpu: 0.0.40
codegen_flags: <defaults>
</compile_context>

<pallas_src>
import jax
import jax.numpy as jnp
from jax.experimental import pallas as pl
from jax.experimental.pallas import tpu as pltpu

LANE = 128       # lane width: head output is padded to a multiple of this
MIN_TILE = 16    # batch-tile granularity (bf16 sublane packing)
TILE_CAP = 512   # per-step batch-tile cap (activations are tiny vs weights)


def _round_up(x, m):
    return ((x + m - 1) // m) * m


def _cdiv(a, b):
    return -(-a // b)


def actor_kernel(goal_ref, obs_ref,
                 w1g_ref, w1o_ref, b1_ref,
                 w2_ref, b2_ref,
                 w3_ref, b3_ref,
                 w4_ref, b4_ref,
                 wh_ref, bh_ref,
                 mu_ref):
    # Layer 1 with the concat fused: x @ W1 == goal @ W1[:gd] + obs @ W1[gd:].
    # goal/obs and all weights arrive as bf16; the MXU accumulates in f32.
    h = jnp.dot(goal_ref[...], w1g_ref[...], preferred_element_type=jnp.float32)
    h = h + jnp.dot(obs_ref[...], w1o_ref[...], preferred_element_type=jnp.float32)
    h = jnp.maximum(h + b1_ref[...], 0.0)   # bias/ReLU in f32 (no bf16 VPU on v5e)
    # Layers 2-4: cast activation to bf16 for the MXU, keep elementwise in f32.
    for w_ref, b_ref in ((w2_ref, b2_ref), (w3_ref, b3_ref), (w4_ref, b4_ref)):
        h = jnp.maximum(
            jnp.dot(h.astype(jnp.bfloat16), w_ref[...],
                    preferred_element_type=jnp.float32) + b_ref[...],
            0.0)
    # Head (single Linear, no trailing activation) then tanh. Output is a
    # lane-dense 128-wide slab; true action columns are sliced in the wrapper.
    mu_ref[...] = jnp.tanh(
        jnp.dot(h.astype(jnp.bfloat16), wh_ref[...],
                preferred_element_type=jnp.float32) + bh_ref[...])


def actor_forward(obs, goal, std, params):
    """Returns (mu, std) — the parameters of utils.TruncatedNormal(mu, std)."""
    obs = obs.astype(jnp.float32)
    goal = goal.astype(jnp.float32)

    B, repr_dim = obs.shape
    goal_dim = goal.shape[-1]
    hidden_dim = params["w2"].shape[0]
    action_dim = params["wh"].shape[-1]
    a_pad = _round_up(action_dim, LANE)

    # ---- batch tiling: balanced tiles, >=2 grid steps when B allows (v7x) ----
    if B >= 2 * MIN_TILE:
        n_steps = max(_cdiv(B, TILE_CAP), 2)
    else:
        n_steps = 1
    tm = _round_up(_cdiv(B, n_steps), MIN_TILE)
    Bp = tm * n_steps
    if Bp != B:
        pad = ((0, Bp - B), (0, 0))
        obs = jnp.pad(obs, pad)
        goal = jnp.pad(goal, pad)

    # Inputs in bf16 (halves DMA bytes; MXU takes bf16 x bf16 -> f32).
    goal_bf = goal.astype(jnp.bfloat16)
    obs_bf = obs.astype(jnp.bfloat16)

    # ---- one-time host-side weight prep ----
    # Split W1 along the concat boundary (cat order is [goal, obs]), cast all
    # weight matrices to bf16, pad the head to a lane-dense width.  Biases stay
    # f32 and are reshaped to (1, out) so PyTorch-style (out,) biases also work.
    w1 = params["w1"].astype(jnp.bfloat16)
    w1g, w1o = w1[:goal_dim], w1[goal_dim:]
    w2 = params["w2"].astype(jnp.bfloat16)
    w3 = params["w3"].astype(jnp.bfloat16)
    w4 = params["w4"].astype(jnp.bfloat16)
    wh = jnp.pad(params["wh"].astype(jnp.bfloat16),
                 ((0, 0), (0, a_pad - action_dim)))
    b1 = params["b1"].reshape(1, -1).astype(jnp.float32)
    b2 = params["b2"].reshape(1, -1).astype(jnp.float32)
    b3 = params["b3"].reshape(1, -1).astype(jnp.float32)
    b4 = params["b4"].reshape(1, -1).astype(jnp.float32)
    bh = jnp.pad(params["bh"].reshape(1, -1).astype(jnp.float32),
                 ((0, 0), (0, a_pad - action_dim)))

    grid = (n_steps,)

    def batch_tile(cols):
        return pl.BlockSpec((tm, cols), lambda i: (i, 0))

    def resident(shape):
        # Full-extent block, same block index every grid step -> fetched once
        # and kept in VMEM.  Buffered(1): no pointless double-buffer.
        return pl.BlockSpec(shape, lambda i: (0, 0),
                            pipeline_mode=pl.Buffered(1))

    in_specs = [
        batch_tile(goal_dim),                      # goal (bf16)
        batch_tile(repr_dim),                      # obs  (bf16)
        resident((goal_dim, hidden_dim)),          # w1g  (bf16)
        resident((repr_dim, hidden_dim)),          # w1o  (bf16)
        resident((1, hidden_dim)),                 # b1   (f32)
        resident((hidden_dim, hidden_dim)),        # w2
        resident((1, hidden_dim)),                 # b2
        resident((hidden_dim, hidden_dim)),        # w3
        resident((1, hidden_dim)),                 # b3
        resident((hidden_dim, hidden_dim)),        # w4
        resident((1, hidden_dim)),                 # b4
        resident((hidden_dim, a_pad)),             # wh (padded, bf16)
        resident((1, a_pad)),                      # bh (padded, f32)
    ]
    out_spec = pl.BlockSpec((tm, a_pad), lambda i: (i, 0))

    # ---- explicit VMEM budget for the residency plan (headroom included) ----
    BF16, F32 = 2, 4
    weight_bytes = (goal_dim * hidden_dim + repr_dim * hidden_dim
                    + 3 * hidden_dim * hidden_dim + hidden_dim * a_pad) * BF16
    bias_bytes = (4 * hidden_dim + a_pad) * F32
    io_bytes = 2 * tm * (goal_dim + repr_dim) * BF16 + 2 * tm * a_pad * F32
    act_bytes = 4 * tm * hidden_dim * F32          # rough f32+bf16 working set
    vmem_needed = weight_bytes + bias_bytes + io_bytes + act_bytes
    vmem_limit = int(min(max(int(vmem_needed * 1.5) + (8 << 20), 32 << 20),
                         64 << 20))                # clamp to v7x's 64 MiB/TC

    mu_padded = pl.pallas_call(
        actor_kernel,
        out_shape=jax.ShapeDtypeStruct((Bp, a_pad), jnp.float32),
        grid_spec=pltpu.PrefetchScalarGridSpec(
            num_scalar_prefetch=0,
            grid=grid,
            in_specs=in_specs,
            out_specs=out_spec,
        ),
        compiler_params=pltpu.CompilerParams(
            dimension_semantics=("parallel",),     # shards batch across TCs on v7x
            vmem_limit_bytes=vmem_limit),
    )(
        goal_bf, obs_bf,
        w1g, w1o, b1,
        w2, b2,
        w3, b3,
        w4, b4,
        wh, bh,
    )

    mu = mu_padded[:B, :action_dim]
    # std is a data-independent constant broadcast — no kernel work needed.
    std_out = jnp.full((B, action_dim), std, jnp.float32)
    return mu, std_out


def init_params(key, repr_dim, goal_dim, hidden_dim, action_dim):
    """Deterministic synthetic init (stand-in for utils.weight_init)."""
    dims = [(repr_dim + goal_dim, hidden_dim),
            (hidden_dim, hidden_dim),
            (hidden_dim, hidden_dim),
            (hidden_dim, hidden_dim),
            (hidden_dim, action_dim)]
    names = ["1", "2", "3", "4", "h"]
    params = {}
    for name, (din, dout) in zip(names, dims):
        key, kw = jax.random.split(key)
        scale = 1.0 / jnp.sqrt(jnp.float32(din))
        params[f"w{name}"] = jax.random.normal(kw, (din, dout), jnp.float32) * scale
        params[f"b{name}"] = jnp.zeros((1, dout), jnp.float32)
    return params


if __name__ == "__main__":
    # Small shapes consistent with the module:
    #   repr_dim=32, goal_dim=32 (goal_modality='states' -> goal_dim unchanged),
    #   hidden_dim=32, action_shape=(4,), batch=8
    B, repr_dim, goal_dim, hidden_dim, action_dim = 8, 32, 32, 32, 4

    key = jax.random.PRNGKey(0)
    k_obs, k_goal, k_params = jax.random.split(key, 3)
    obs = jax.random.normal(k_obs, (B, repr_dim), jnp.float32)
    goal = jax.random.normal(k_goal, (B, goal_dim), jnp.float32)
    std_scalar = 0.2

    params = init_params(k_params, repr_dim, goal_dim, hidden_dim, action_dim)

    mu, std_out = actor_forward(obs, goal, std_scalar, params)
    jax.block_until_ready((mu, std_out))

    # Reference check in plain JAX (f32).  bf16 weights/activations in the
    # kernel -> loosen the tolerance (accumulation stays f32, tanh is bounded).
    x = jnp.concatenate([goal, obs], axis=-1)
    h = x
    for n in ["1", "2", "3", "4"]:
        h = jnp.maximum(h @ params[f"w{n}"] + params[f"b{n}"], 0.0)
    mu_ref = jnp.tanh(h @ params["wh"] + params["bh"])
    assert mu.shape == (B, action_dim)
    assert jnp.allclose(mu, mu_ref, atol=3e-2, rtol=3e-2), "mu mismatch"
    assert jnp.allclose(std_out, jnp.full_like(mu_ref, std_scalar)), "std mismatch"

    # TODO(synk): TruncatedNormal distribution object (sampling/log_prob) has no
    # Pallas equivalent here; kernel returns its parameters (mu, std).
    print("KERNEL_OK")
</pallas_src>

<mosaic_0001>
module attributes {stable_mosaic.version = 11 : i64} {
  func.func @actor_kernel(%arg0: i32, %arg1: memref<16x32xbf16, #tpu.memory_space<vmem>>, %arg2: memref<16x32xbf16, #tpu.memory_space<vmem>>, %arg3: memref<32x32xbf16, #tpu.memory_space<vmem>>, %arg4: memref<32x32xbf16, #tpu.memory_space<vmem>>, %arg5: memref<1x32xf32, #tpu.memory_space<vmem>>, %arg6: memref<32x32xbf16, #tpu.memory_space<vmem>>, %arg7: memref<1x32xf32, #tpu.memory_space<vmem>>, %arg8: memref<32x32xbf16, #tpu.memory_space<vmem>>, %arg9: memref<1x32xf32, #tpu.memory_space<vmem>>, %arg10: memref<32x32xbf16, #tpu.memory_space<vmem>>, %arg11: memref<1x32xf32, #tpu.memory_space<vmem>>, %arg12: memref<32x128xbf16, #tpu.memory_space<vmem>>, %arg13: memref<1x128xf32, #tpu.memory_space<vmem>>, %arg14: memref<16x128xf32, #tpu.memory_space<vmem>>) attributes {dimension_semantics = [#tpu.dimension_semantics<parallel>], iteration_bounds = array<i64: 1>, scalar_prefetch = 0 : i64, scratch_operands = 0 : i64, tpu.core_type = #tpu.core_type<tc>, window_params = [{transform_indices = @transform_0, window_bounds = array<i64: 16, 32>}, {transform_indices = @transform_1, window_bounds = array<i64: 16, 32>}, {pipeline_mode = #tpu.pipeline_mode<synchronous>, transform_indices = @transform_2, window_bounds = array<i64: 32, 32>}, {pipeline_mode = #tpu.pipeline_mode<synchronous>, transform_indices = @transform_3, window_bounds = array<i64: 32, 32>}, {pipeline_mode = #tpu.pipeline_mode<synchronous>, transform_indices = @transform_4, window_bounds = array<i64: 1, 32>}, {pipeline_mode = #tpu.pipeline_mode<synchronous>, transform_indices = @transform_5, window_bounds = array<i64: 32, 32>}, {pipeline_mode = #tpu.pipeline_mode<synchronous>, transform_indices = @transform_6, window_bounds = array<i64: 1, 32>}, {pipeline_mode = #tpu.pipeline_mode<synchronous>, transform_indices = @transform_7, window_bounds = array<i64: 32, 32>}, {pipeline_mode = #tpu.pipeline_mode<synchronous>, transform_indices = @transform_8, window_bounds = array<i64: 1, 32>}, {pipeline_mode = #tpu.pipeline_mode<synchronous>, transform_indices = @transform_9, window_bounds = array<i64: 32, 32>}, {pipeline_mode = #tpu.pipeline_mode<synchronous>, transform_indices = @transform_10, window_bounds = array<i64: 1, 32>}, {pipeline_mode = #tpu.pipeline_mode<synchronous>, transform_indices = @transform_11, window_bounds = array<i64: 32, 128>}, {pipeline_mode = #tpu.pipeline_mode<synchronous>, transform_indices = @transform_12, window_bounds = array<i64: 1, 128>}, {transform_indices = @transform_13, window_bounds = array<i64: 16, 128>}]} {
    %c0 = arith.constant 0 : index
    %c0_0 = arith.constant 0 : index
    %0 = vector.load %arg1[%c0, %c0_0] : memref<16x32xbf16, #tpu.memory_space<vmem>>, vector<16x32xbf16>
    %c0_1 = arith.constant 0 : index
    %c0_2 = arith.constant 0 : index
    %1 = vector.load %arg3[%c0_1, %c0_2] : memref<32x32xbf16, #tpu.memory_space<vmem>>, vector<32x32xbf16>
    %cst = arith.constant dense<0.000000e+00> : vector<16x32xf32>
    %2 = tpu.matmul %0, %1, %cst {dimension_numbers = #tpu.dot_dimension_numbers<[1], [0], [0], [1], [0, 0, 1, 1], [], []>} : vector<16x32xbf16>, vector<32x32xbf16>, vector<16x32xf32> -> vector<16x32xf32>
    %c0_3 = arith.constant 0 : index
    %c0_4 = arith.constant 0 : index
    %3 = vector.load %arg2[%c0_3, %c0_4] : memref<16x32xbf16, #tpu.memory_space<vmem>>, vector<16x32xbf16>
    %c0_5 = arith.constant 0 : index
    %c0_6 = arith.constant 0 : index
    %4 = vector.load %arg4[%c0_5, %c0_6] : memref<32x32xbf16, #tpu.memory_space<vmem>>, vector<32x32xbf16>
    %cst_7 = arith.constant dense<0.000000e+00> : vector<16x32xf32>
    %5 = tpu.matmul %3, %4, %cst_7 {dimension_numbers = #tpu.dot_dimension_numbers<[1], [0], [0], [1], [0, 0, 1, 1], [], []>} : vector<16x32xbf16>, vector<32x32xbf16>, vector<16x32xf32> -> vector<16x32xf32>
    %6 = arith.addf %2, %5 : vector<16x32xf32>
    %c0_8 = arith.constant 0 : index
    %c0_9 = arith.constant 0 : index
    %7 = vector.load %arg5[%c0_8, %c0_9] : memref<1x32xf32, #tpu.memory_space<vmem>>, vector<1x32xf32>
    %8 = vector.broadcast %7 : vector<1x32xf32> to vector<16x32xf32>
    %9 = arith.addf %6, %8 : vector<16x32xf32>
    %cst_10 = arith.constant 0.000000e+00 : f32
    %10 = vector.broadcast %cst_10 : f32 to vector<16x32xf32>
    %11 = arith.maximumf %9, %10 : vector<16x32xf32>
    %12 = arith.truncf %11 : vector<16x32xf32> to vector<16x32xbf16>
    %c0_11 = arith.constant 0 : index
    %c0_12 = arith.constant 0 : index
    %13 = vector.load %arg6[%c0_11, %c0_12] : memref<32x32xbf16, #tpu.memory_space<vmem>>, vector<32x32xbf16>
    %cst_13 = arith.constant dense<0.000000e+00> : vector<16x32xf32>
    %14 = tpu.matmul %12, %13, %cst_13 {dimension_numbers = #tpu.dot_dimension_numbers<[1], [0], [0], [1], [0, 0, 1, 1], [], []>} : vector<16x32xbf16>, vector<32x32xbf16>, vector<16x32xf32> -> vector<16x32xf32>
    %c0_14 = arith.constant 0 : index
    %c0_15 = arith.constant 0 : index
    %15 = vector.load %arg7[%c0_14, %c0_15] : memref<1x32xf32, #tpu.memory_space<vmem>>, vector<1x32xf32>
    %16 = vector.broadcast %15 : vector<1x32xf32> to vector<16x32xf32>
    %17 = arith.addf %14, %16 : vector<16x32xf32>
    %cst_16 = arith.constant 0.000000e+00 : f32
    %18 = vector.broadcast %cst_16 : f32 to vector<16x32xf32>
    %19 = arith.maximumf %17, %18 : vector<16x32xf32>
    %20 = arith.truncf %19 : vector<16x32xf32> to vector<16x32xbf16>
    %c0_17 = arith.constant 0 : index
    %c0_18 = arith.constant 0 : index
    %21 = vector.load %arg8[%c0_17, %c0_18] : memref<32x32xbf16, #tpu.memory_space<vmem>>, vector<32x32xbf16>
    %cst_19 = arith.constant dense<0.000000e+00> : vector<16x32xf32>
    %22 = tpu.matmul %20, %21, %cst_19 {dimension_numbers = #tpu.dot_dimension_numbers<[1], [0], [0], [1], [0, 0, 1, 1], [], []>} : vector<16x32xbf16>, vector<32x32xbf16>, vector<16x32xf32> -> vector<16x32xf32>
    %c0_20 = arith.constant 0 : index
    %c0_21 = arith.constant 0 : index
    %23 = vector.load %arg9[%c0_20, %c0_21] : memref<1x32xf32, #tpu.memory_space<vmem>>, vector<1x32xf32>
    %24 = vector.broadcast %23 : vector<1x32xf32> to vector<16x32xf32>
    %25 = arith.addf %22, %24 : vector<16x32xf32>
    %cst_22 = arith.constant 0.000000e+00 : f32
    %26 = vector.broadcast %cst_22 : f32 to vector<16x32xf32>
    %27 = arith.maximumf %25, %26 : vector<16x32xf32>
    %28 = arith.truncf %27 : vector<16x32xf32> to vector<16x32xbf16>
    %c0_23 = arith.constant 0 : index
    %c0_24 = arith.constant 0 : index
    %29 = vector.load %arg10[%c0_23, %c0_24] : memref<32x32xbf16, #tpu.memory_space<vmem>>, vector<32x32xbf16>
    %cst_25 = arith.constant dense<0.000000e+00> : vector<16x32xf32>
    %30 = tpu.matmul %28, %29, %cst_25 {dimension_numbers = #tpu.dot_dimension_numbers<[1], [0], [0], [1], [0, 0, 1, 1], [], []>} : vector<16x32xbf16>, vector<32x32xbf16>, vector<16x32xf32> -> vector<16x32xf32>
    %c0_26 = arith.constant 0 : index
    %c0_27 = arith.constant 0 : index
    %31 = vector.load %arg11[%c0_26, %c0_27] : memref<1x32xf32, #tpu.memory_space<vmem>>, vector<1x32xf32>
    %32 = vector.broadcast %31 : vector<1x32xf32> to vector<16x32xf32>
    %33 = arith.addf %30, %32 : vector<16x32xf32>
    %cst_28 = arith.constant 0.000000e+00 : f32
    %34 = vector.broadcast %cst_28 : f32 to vector<16x32xf32>
    %35 = arith.maximumf %33, %34 : vector<16x32xf32>
    %36 = arith.truncf %35 : vector<16x32xf32> to vector<16x32xbf16>
    %c0_29 = arith.constant 0 : index
    %c0_30 = arith.constant 0 : index
    %37 = vector.load %arg12[%c0_29, %c0_30] : memref<32x128xbf16, #tpu.memory_space<vmem>>, vector<32x128xbf16>
    %cst_31 = arith.constant dense<0.000000e+00> : vector<16x128xf32>
    %38 = tpu.matmul %36, %37, %cst_31 {dimension_numbers = #tpu.dot_dimension_numbers<[1], [0], [0], [1], [0, 0, 1, 1], [], []>} : vector<16x32xbf16>, vector<32x128xbf16>, vector<16x128xf32> -> vector<16x128xf32>
    %c0_32 = arith.constant 0 : index
    %c0_33 = arith.constant 0 : index
    %39 = vector.load %arg13[%c0_32, %c0_33] : memref<1x128xf32, #tpu.memory_space<vmem>>, vector<1x128xf32>
    %40 = vector.broadcast %39 : vector<1x128xf32> to vector<16x128xf32>
    %41 = arith.addf %38, %40 : vector<16x128xf32>
    %42 = math.tanh %41 : vector<16x128xf32>
    %c0_34 = arith.constant 0 : index
    %c0_35 = arith.constant 0 : index
    %43 = vector.load %arg14[%c0_34, %c0_35] : memref<16x128xf32, #tpu.memory_space<vmem>>, vector<16x128xf32>
    tpu.vector_store %arg14[%c0_34, %c0_35], %42 {strides = array<i32>} : memref<16x128xf32, #tpu.memory_space<vmem>>, vector<16x128xf32>,
    return
  }
  func.func @transform_0(%arg0: i32) -> (i32, i32) {
    %c0_i32 = arith.constant 0 : i32
    %c0_i32_0 = arith.constant 0 : i32
    return %arg0, %c0_i32 : i32, i32
  }
  func.func @transform_1(%arg0: i32) -> (i32, i32) {
    %c0_i32 = arith.constant 0 : i32
    %c0_i32_0 = arith.constant 0 : i32
    return %arg0, %c0_i32 : i32, i32
  }
  func.func @transform_2(%arg0: i32) -> (i32, i32) {
    %c0_i32 = arith.constant 0 : i32
    %c0_i32_0 = arith.constant 0 : i32
    %c0_i32_1 = arith.constant 0 : i32
    return %c0_i32, %c0_i32_0 : i32, i32
  }
  func.func @transform_3(%arg0: i32) -> (i32, i32) {
    %c0_i32 = arith.constant 0 : i32
    %c0_i32_0 = arith.constant 0 : i32
    %c0_i32_1 = arith.constant 0 : i32
    return %c0_i32, %c0_i32_0 : i32, i32
  }
  func.func @transform_4(%arg0: i32) -> (i32, i32) {
    %c0_i32 = arith.constant 0 : i32
    %c0_i32_0 = arith.constant 0 : i32
    %c0_i32_1 = arith.constant 0 : i32
    return %c0_i32, %c0_i32_0 : i32, i32
  }
  func.func @transform_5(%arg0: i32) -> (i32, i32) {
    %c0_i32 = arith.constant 0 : i32
    %c0_i32_0 = arith.constant 0 : i32
    %c0_i32_1 = arith.constant 0 : i32
    return %c0_i32, %c0_i32_0 : i32, i32
  }
  func.func @transform_6(%arg0: i32) -> (i32, i32) {
    %c0_i32 = arith.constant 0 : i32
    %c0_i32_0 = arith.constant 0 : i32
    %c0_i32_1 = arith.constant 0 : i32
    return %c0_i32, %c0_i32_0 : i32, i32
  }
  func.func @transform_7(%arg0: i32) -> (i32, i32) {
    %c0_i32 = arith.constant 0 : i32
    %c0_i32_0 = arith.constant 0 : i32
    %c0_i32_1 = arith.constant 0 : i32
    return %c0_i32, %c0_i32_0 : i32, i32
  }
  func.func @transform_8(%arg0: i32) -> (i32, i32) {
    %c0_i32 = arith.constant 0 : i32
    %c0_i32_0 = arith.constant 0 : i32
    %c0_i32_1 = arith.constant 0 : i32
    return %c0_i32, %c0_i32_0 : i32, i32
  }
  func.func @transform_9(%arg0: i32) -> (i32, i32) {
    %c0_i32 = arith.constant 0 : i32
    %c0_i32_0 = arith.constant 0 : i32
    %c0_i32_1 = arith.constant 0 : i32
    return %c0_i32, %c0_i32_0 : i32, i32
  }
  func.func @transform_10(%arg0: i32) -> (i32, i32) {
    %c0_i32 = arith.constant 0 : i32
    %c0_i32_0 = arith.constant 0 : i32
    %c0_i32_1 = arith.constant 0 : i32
    return %c0_i32, %c0_i32_0 : i32, i32
  }
  func.func @transform_11(%arg0: i32) -> (i32, i32) {
    %c0_i32 = arith.constant 0 : i32
    %c0_i32_0 = arith.constant 0 : i32
    %c0_i32_1 = arith.constant 0 : i32
    return %c0_i32, %c0_i32_0 : i32, i32
  }
  func.func @transform_12(%arg0: i32) -> (i32, i32) {
    %c0_i32 = arith.constant 0 : i32
    %c0_i32_0 = arith.constant 0 : i32
    %c0_i32_1 = arith.constant 0 : i32
    return %c0_i32, %c0_i32_0 : i32, i32
  }
  func.func @transform_13(%arg0: i32) -> (i32, i32) {
    %c0_i32 = arith.constant 0 : i32
    %c0_i32_0 = arith.constant 0 : i32
    return %arg0, %c0_i32 : i32, i32
  }
}

</mosaic_0001>

<llo_original>
// kernel: tpu_custom_call.1
$region0: #{tpu_custom_call.1}
  #allocation0 [shape = 'u32[]', space=smem, size = 0x4, offset = 0x4, fixed_abs, tag = 'smem constant byte address 0x4 - core index']
  #allocation1 [shape = 'u32[144,128]{1,0:T(1,128)}', space=vmem, size = 0x12000, scoped, tag = 'internal scratch']
  %s0 = inlined_call_operand.hbm [shape: bf16[16,32], index: 0, kind: input, shape index: {}]
  %s1 = inlined_call_operand.hbm [shape: bf16[16,32], index: 1, kind: input, shape index: {}]
  %s2 = inlined_call_operand.hbm [shape: bf16[32,32], index: 2, kind: input, shape index: {}]
  %s3 = inlined_call_operand.hbm [shape: bf16[32,32], index: 3, kind: input, shape index: {}]
  %s4 = inlined_call_operand.hbm [shape: f32[1,32], index: 4, kind: input, shape index: {}]
  %s5 = inlined_call_operand.hbm [shape: bf16[32,32], index: 5, kind: input, shape index: {}]
  %s6 = inlined_call_operand.hbm [shape: f32[1,32], index: 6, kind: input, shape index: {}]
  %s7 = inlined_call_operand.hbm [shape: bf16[32,32], index: 7, kind: input, shape index: {}]
  %s8 = inlined_call_operand.hbm [shape: f32[1,32], index: 8, kind: input, shape index: {}]
  %s9 = inlined_call_operand.vmem [shape: bf16[32,32], index: 9, kind: input, shape index: {}]
  %s10 = inlined_call_operand.vmem [shape: f32[1,32], index: 10, kind: input, shape index: {}]
  %s11 = inlined_call_operand.hbm [shape: bf16[32,128], index: 11, kind: input, shape index: {}]
  %s12 = inlined_call_operand.vmem [shape: f32[1,128], index: 12, kind: input, shape index: {}]
  %s13 = inlined_call_operand.hbm [shape: f32[16,128], index: 13, kind: output, shape index: {}]
  %s14 = sld [smem:[#allocation0]]
  $region102: #{tpu_custom_call.1} parent=0
    _
  %s16 = ssub.s32 1, %s14
  %s17 = scalar_select 0, %s16, %s14
  $region1: #{tpu_custom_call.1} parent=0
    #allocation2 [shape = 'u8[4096]{0}', space=vmem, size = 0x1000, scoped, tag = 'input window, operand 0, single buffered']
    #allocation3 [shape = 's32[1]{0}', space=sflag, size = 0x4, scoped, tag = 'scoped memory for tpu_custom_call.1']
    #allocation4 [shape = 's32[1]{0}', space=sflag, size = 0x4, scoped, tag = 'scoped memory for tpu_custom_call.1']
    #allocation5 [shape = 'u8[4096]{0}', space=vmem, size = 0x1000, scoped, tag = 'input window, operand 1, single buffered']
    #allocation6 [shape = 's32[1]{0}', space=sflag, size = 0x4, scoped, tag = 'scoped memory for tpu_custom_call.1']
    #allocation7 [shape = 'u8[8192]{0}', space=vmem, size = 0x2000, scoped, tag = 'input window, operand 2, single buffered']
    #allocation8 [shape = 'u8[8192]{0}', space=vmem, size = 0x2000, scoped, tag = 'input window, operand 3, single buffered']
    #allocation9 [shape = 's32[1]{0}', space=sflag, size = 0x4, scoped, tag = 'scoped memory for tpu_custom_call.1']
    #allocation10 [shape = 'u8[512]{0}', space=vmem, size = 0x400, scoped, tag = 'input window, operand 4, single buffered']
    #allocation11 [shape = 'u8[8192]{0}', space=vmem, size = 0x2000, scoped, tag = 'input window, operand 5, single buffered']
    #allocation12 [shape = 's32[1]{0}', space=sflag, size = 0x4, scoped, tag = 'scoped memory for tpu_custom_call.1']
    #allocation13 [shape = 'u8[512]{0}', space=vmem, size = 0x400, scoped, tag = 'input window, operand 6, single buffered']
    #allocation14 [shape = 'u8[8192]{0}', space=vmem, size = 0x2000, scoped, tag = 'input window, operand 7, single buffered']
    #allocation15 [shape = 's32[1]{0}', space=sflag, size = 0x4, scoped, tag = 'scoped memory for tpu_custom_call.1']
    #allocation16 [shape = 'u8[512]{0}', space=vmem, size = 0x400, scoped, tag = 'input window, operand 8, single buffered']
    #allocation17 [shape = 'u8[8192]{0}', space=vmem, size = 0x2000, scoped, tag = 'input window, operand 11, single buffered']
    #allocation18 [shape = 's32[1]{0}', space=sflag, size = 0x4, scoped, tag = 'scoped memory for tpu_custom_call.1']
    #allocation19 [shape = 'u8[8192]{0}', space=vmem, size = 0x2000, scoped, tag = 'output window, operand 0, single buffered']
    %18 = vsyncpa [#allocation3], 0
    %19 = vsyncpa [#allocation6], 0
    %20 = vsyncpa [#allocation9], 0
    %21 = vsyncpa [#allocation12], 0
    %22 = vsyncpa [#allocation15], 0
    %23 = vsyncpa [#allocation18], 0
    %24 = vsyncpa [#allocation4], 0
    // Predicated region
    $region2: #{tpu_custom_call.1} parent=1 // pred_check
      _
    $region3: #{tpu_custom_call.1} parent=1 // pred_check_branch
      %26 = sbr.rel (0) target = $region5
    $region4: #{tpu_custom_call.1} parent=1 // pred_region
      %s28 = ssub.s32 128, 128
      %29 = vsyncadd [#allocation3], %s28
      %s30 = sshll.u32 [#allocation2], 4
      %s31 = int_to_ptr.vmem [resolvable:$true] %s30
      %36 = dma.hbm_to_vmem [thread:$0]  %s0, 128, %s31, [#allocation3], 64, 64, 4
    $region5: #{tpu_custom_call.1} parent=1 // pred_fallthru
      _
    // Predicated region
    $region6: #{tpu_custom_call.1} parent=1 // pred_check
      _
    $region7: #{tpu_custom_call.1} parent=1 // pred_check_branch
      %38 = sbr.rel (0) target = $region9
    $region8: #{tpu_custom_call.1} parent=1 // pred_region
      %s40 = ssub.s32 128, 128
      %41 = vsyncadd [#allocation6], %s40
      %s42 = sshll.u32 [#allocation5], 4
      %s43 = int_to_ptr.vmem [resolvable:$true] %s42
      %48 = dma.hbm_to_vmem [thread:$0]  %s1, 128, %s43, [#allocation6], 64, 64, 4
    $region9: #{tpu_custom_call.1} parent=1 // pred_fallthru
      _
    // Predicated region
    $region10: #{tpu_custom_call.1} parent=1 // pred_check
      _
    $region11: #{tpu_custom_call.1} parent=1 // pred_check_branch
      %50 = sbr.rel (0) target = $region13
    $region12: #{tpu_custom_call.1} parent=1 // pred_region
      %s52 = ssub.s32 256, 256
      %53 = vsyncadd [#allocation6], %s52
      %s54 = sshll.u32 [#allocation7], 4
      %s55 = int_to_ptr.vmem [resolvable:$true] %s54
      %60 = dma.hbm_to_vmem [thread:$0]  %s2, 256, %s55, [#allocation6], 64, 64, 4
    $region13: #{tpu_custom_call.1} parent=1 // pred_fallthru
      _
    // Predicated region
    $region14: #{tpu_custom_call.1} parent=1 // pred_check
      _
    $region15: #{tpu_custom_call.1} parent=1 // pred_check_branch
      %62 = sbr.rel (0) target = $region17
    $region16: #{tpu_custom_call.1} parent=1 // pred_region
      %s64 = ssub.s32 256, 256
      %65 = vsyncadd [#allocation9], %s64
      %s66 = sshll.u32 [#allocation8], 4
      %s67 = int_to_ptr.vmem [resolvable:$true] %s66
      %72 = dma.hbm_to_vmem [thread:$0]  %s3, 256, %s67, [#allocation9], 64, 64, 4
    $region17: #{tpu_custom_call.1} parent=1 // pred_fallthru
      _
    // Predicated region
    $region18: #{tpu_custom_call.1} parent=1 // pred_check
      _
    $region19: #{tpu_custom_call.1} parent=1 // pred_check_branch
      %74 = sbr.rel (0) target = $region21
    $region20: #{tpu_custom_call.1} parent=1 // pred_region
      %s76 = ssub.s32 16, 16
      %77 = vsyncadd [#allocation9], %s76
      %s79 = sshll.u32 [#allocation10], 4
      %s80 = int_to_ptr.vmem [resolvable:$true] %s79
      %82 = dma.hbm_to_vmem [thread:$0]  %s4, 16, %s80, [#allocation9]
    $region21: #{tpu_custom_call.1} parent=1 // pred_fallthru
      _
    // Predicated region
    $region22: #{tpu_custom_call.1} parent=1 // pred_check
      _
    $region23: #{tpu_custom_call.1} parent=1 // pred_check_branch
      %84 = sbr.rel (0) target = $region25
    $region24: #{tpu_custom_call.1} parent=1 // pred_region
      %s86 = ssub.s32 256, 256
      %87 = vsyncadd [#allocation12], %s86
      %s88 = sshll.u32 [#allocation11], 4
      %s89 = int_to_ptr.vmem [resolvable:$true] %s88
      %94 = dma.hbm_to_vmem [thread:$0]  %s5, 256, %s89, [#allocation12], 64, 64, 4
    $region25: #{tpu_custom_call.1} parent=1 // pred_fallthru
      _
    // Predicated region
    $region26: #{tpu_custom_call.1} parent=1 // pred_check
      _
    $region27: #{tpu_custom_call.1} parent=1 // pred_check_branch
      %96 = sbr.rel (0) target = $region29
    $region28: #{tpu_custom_call.1} parent=1 // pred_region
      %s98 = ssub.s32 16, 16
      %99 = vsyncadd [#allocation12], %s98
      %s101 = sshll.u32 [#allocation13], 4
      %s102 = int_to_ptr.vmem [resolvable:$true] %s101
      %104 = dma.hbm_to_vmem [thread:$0]  %s6, 16, %s102, [#allocation12]
    $region29: #{tpu_custom_call.1} parent=1 // pred_fallthru
      _
    // Predicated region
    $region30: #{tpu_custom_call.1} parent=1 // pred_check
      _
    $region31: #{tpu_custom_call.1} parent=1 // pred_check_branch
      %106 = sbr.rel (0) target = $region33
    $region32: #{tpu_custom_call.1} parent=1 // pred_region
      %s108 = ssub.s32 256, 256
      %109 = vsyncadd [#allocation15], %s108
      %s110 = sshll.u32 [#allocation14], 4
      %s111 = int_to_ptr.vmem [resolvable:$true] %s110
      %116 = dma.hbm_to_vmem [thread:$0]  %s7, 256, %s111, [#allocation15], 64, 64, 4
    $region33: #{tpu_custom_call.1} parent=1 // pred_fallthru
      _
    // Predicated region
    $region34: #{tpu_custom_call.1} parent=1 // pred_check
      _
    $region35: #{tpu_custom_call.1} parent=1 // pred_check_branch
      %118 = sbr.rel (0) target = $region37
    $region36: #{tpu_custom_call.1} parent=1 // pred_region
      %s120 = ssub.s32 16, 16
      %121 = vsyncadd [#allocation15], %s120
      %s123 = sshll.u32 [#allocation16], 4
      %s124 = int_to_ptr.vmem [resolvable:$true] %s123
      %126 = dma.hbm_to_vmem [thread:$0]  %s8, 16, %s124, [#allocation15]
    $region37: #{tpu_custom_call.1} parent=1 // pred_fallthru
      _
    // Predicated region
    $region38: #{tpu_custom_call.1} parent=1 // pred_check
      _
    $region39: #{tpu_custom_call.1} parent=1 // pred_check_branch
      %128 = sbr.rel (0) target = $region41
    $region40: #{tpu_custom_call.1} parent=1 // pred_region
      _
    $region41: #{tpu_custom_call.1} parent=1 // pred_fallthru
      _
    // Predicated region
    $region42: #{tpu_custom_call.1} parent=1 // pred_check
      _
    $region43: #{tpu_custom_call.1} parent=1 // pred_check_branch
      %130 = sbr.rel (0) target = $region45
    $region44: #{tpu_custom_call.1} parent=1 // pred_region
      _
    $region45: #{tpu_custom_call.1} parent=1 // pred_fallthru
      _
    // Predicated region
    $region46: #{tpu_custom_call.1} parent=1 // pred_check
      _
    $region47: #{tpu_custom_call.1} parent=1 // pred_check_branch
      %132 = sbr.rel (0) target = $region49
    $region48: #{tpu_custom_call.1} parent=1 // pred_region
      %s134 = ssub.s32 256, 256
      %135 = vsyncadd [#allocation18], %s134
      %s136 = sshll.u32 [#allocation17], 4
      %s137 = int_to_ptr.vmem [resolvable:$true] %s136
      %142 = dma.hbm_to_vmem [thread:$0]  %s11, 256, %s137, [#allocation18], 64, 64, 4
    $region49: #{tpu_custom_call.1} parent=1 // pred_fallthru
      _
    // Predicated region
    $region50: #{tpu_custom_call.1} parent=1 // pred_check
      _
    $region51: #{tpu_custom_call.1} parent=1 // pred_check_branch
      %144 = sbr.rel (0) target = $region53
    $region52: #{tpu_custom_call.1} parent=1 // pred_region
      _
    $region53: #{tpu_custom_call.1} parent=1 // pred_fallthru
      _
    // Predicated region
    $region54: #{tpu_custom_call.1} parent=1 // pred_check
      _
    $region55: #{tpu_custom_call.1} parent=1 // pred_check_branch
      %146 = sbr.rel (0) target = $region57
    $region56: #{tpu_custom_call.1} parent=1 // pred_region
      %147 = dma.done [#allocation3], 128
    $region57: #{tpu_custom_call.1} parent=1 // pred_fallthru
      _
    // Predicated region
    $region58: #{tpu_custom_call.1} parent=1 // pred_check
      _
    $region59: #{tpu_custom_call.1} parent=1 // pred_check_branch
      %149 = sbr.rel (0) target = $region61
    $region60: #{tpu_custom_call.1} parent=1 // pred_region
      %150 = dma.done [#allocation6], 128
    $region61: #{tpu_custom_call.1} parent=1 // pred_fallthru
      _
    // Predicated region
    $region62: #{tpu_custom_call.1} parent=1 // pred_check
      _
    $region63: #{tpu_custom_call.1} parent=1 // pred_check_branch
      %152 = sbr.rel (0) target = $region65
    $region64: #{tpu_custom_call.1} parent=1 // pred_region
      %153 = dma.done [#allocation6], 256
    $region65: #{tpu_custom_call.1} parent=1 // pred_fallthru
      _
    // Predicated region
    $region66: #{tpu_custom_call.1} parent=1 // pred_check
      _
    $region67: #{tpu_custom_call.1} parent=1 // pred_check_branch
      %155 = sbr.rel (0) target = $region69
    $region68: #{tpu_custom_call.1} parent=1 // pred_region
      %156 = dma.done [#allocation9], 256
    $region69: #{tpu_custom_call.1} parent=1 // pred_fallthru
      _
    // Predicated region
    $region70: #{tpu_custom_call.1} parent=1 // pred_check
      _
    $region71: #{tpu_custom_call.1} parent=1 // pred_check_branch
      %158 = sbr.rel (0) target = $region73
    $region72: #{tpu_custom_call.1} parent=1 // pred_region
      %159 = dma.done [#allocation9], 16
    $region73: #{tpu_custom_call.1} parent=1 // pred_fallthru
      _
    // Predicated region
    $region74: #{tpu_custom_call.1} parent=1 // pred_check
      _
    $region75: #{tpu_custom_call.1} parent=1 // pred_check_branch
      %161 = sbr.rel (0) target = $region77
    $region76: #{tpu_custom_call.1} parent=1 // pred_region
      %162 = dma.done [#allocation12], 256
    $region77: #{tpu_custom_call.1} parent=1 // pred_fallthru
      _
    // Predicated region
    $region78: #{tpu_custom_call.1} parent=1 // pred_check
      _
    $region79: #{tpu_custom_call.1} parent=1 // pred_check_branch
      %164 = sbr.rel (0) target = $region81
    $region80: #{tpu_custom_call.1} parent=1 // pred_region
      %165 = dma.done [#allocation12], 16
    $region81: #{tpu_custom_call.1} parent=1 // pred_fallthru
      _
    // Predicated region
    $region82: #{tpu_custom_call.1} parent=1 // pred_check
      _
    $region83: #{tpu_custom_call.1} parent=1 // pred_check_branch
      %167 = sbr.rel (0) target = $region85
    $region84: #{tpu_custom_call.1} parent=1 // pred_region
      %168 = dma.done [#allocation15], 256
    $region85: #{tpu_custom_call.1} parent=1 // pred_fallthru
      _
    // Predicated region
    $region86: #{tpu_custom_call.1} parent=1 // pred_check
      _
    $region87: #{tpu_custom_call.1} parent=1 // pred_check_branch
      %170 = sbr.rel (0) target = $region89
    $region88: #{tpu_custom_call.1} parent=1 // pred_region
      %171 = dma.done [#allocation15], 16
    $region89: #{tpu_custom_call.1} parent=1 // pred_fallthru
      _
    // Predicated region
    $region90: #{tpu_custom_call.1} parent=1 // pred_check
      _
    $region91: #{tpu_custom_call.1} parent=1 // pred_check_branch
      %173 = sbr.rel (0) target = $region93
    $region92: #{tpu_custom_call.1} parent=1 // pred_region
      %174 = dma.done [#allocation18], 256
    $region93: #{tpu_custom_call.1} parent=1 // pred_fallthru
      _
    %v176 = vld [vmem:[#allocation2] sm:$0xf]
    %v177 = vld [vmem:[#allocation2 + $0x4] sm:$0xf]
    %v178 = vld [vmem:[#allocation7] sm:$0xf]
    %v179 = vld [vmem:[#allocation7 + $0x4] sm:$0xf]
    %v180 = vld [vmem:[#allocation7 + $0x8] sm:$0xf]
    %v181 = vld [vmem:[#allocation7 + $0xc] sm:$0xf]
    %v182 = vld [vmem:[#allocation5] sm:$0xf]
    %v183 = vld [vmem:[#allocation5 + $0x4] sm:$0xf]
    %v184 = vld [vmem:[#allocation8] sm:$0xf]
    %v185 = vld [vmem:[#allocation8 + $0x4] sm:$0xf]
    %v186 = vld [vmem:[#allocation8 + $0x8] sm:$0xf]
    %v187 = vld [vmem:[#allocation8 + $0xc] sm:$0xf]
    %v190 = vunpack.c.l.b16 %v182
    %v191 = vunpack.c.l.b16 %v183
    %v192 = vpack.c.b16 %v191, %v190
    %v197 = vunpack.c.l.b16 %v184
    %v198 = vunpack.c.l.b16 %v185
    %v199 = vunpack.c.l.b16 %v186
    %v200 = vunpack.c.l.b16 %v187
    %v201 = vpack.c.b16 %v198, %v197
    %v202 = vpack.c.b16 %v200, %v199
    %vm205 = vcmask 261120
    %v207 = vsel %vm205, %v192, 0
    %209 = vmatprep.subr.bf16.mxu0 0
    %210 = vmatpush1.bf16.msra.mxu0 0
    %211 = vmatprep.subr.bf16.mxu0 0
    %212 = vmatpush1.bf16.msra.mxu0 0
    %213 = vmatprep.subr.bf16.mxu0 0
    %214 = vmatpush1.bf16.msra.mxu0 0
    %215 = vmatprep.subr.bf16.mxu0 0
    %216 = vmatpush1.bf16.msra.mxu0 0
    %217 = vmatprep.subr.bf16.mxu0 0
    %218 = vmatpush1.bf16.msra.mxu0 0
    %219 = vmatprep.subr.bf16.mxu0 0
    %220 = vmatpush1.bf16.msra.mxu0 0
    %221 = vmatprep.subr.bf16.mxu0 0
    %222 = vmatpush1.bf16.msra.mxu0 %v202
    %223 = vmatprep.subr.bf16.mxu0 0
    %224 = vmatpush1.bf16.msra.mxu0 %v201
    %225 = vmatprep.subr.bf16.mxu0 0
    %226 = vmatpush2.bf16.msra.mxu0 0
    %227 = vmatprep.subr.bf16.mxu0 0
    %228 = vmatpush2.bf16.msra.mxu0 0
    %229 = vmatprep.subr.bf16.mxu0 0
    %230 = vmatpush2.bf16.msra.mxu0 0
    %231 = vmatprep.subr.bf16.mxu0 0
    %232 = vmatpush2.bf16.msra.mxu0 0
    %233 = vmatprep.subr.bf16.mxu0 0
    %234 = vmatpush2.bf16.msra.mxu0 0
    %235 = vmatprep.subr.bf16.mxu0 0
    %236 = vmatpush2.bf16.msra.mxu0 0
    %237 = vmatprep.subr.bf16.mxu0 0
    %238 = vmatpush2.bf16.msra.mxu0 0
    %239 = vmatprep.subr.bf16.mxu0 0
    %240 = vmatpush2.bf16.msra.mxu0 0
    %241 = vmatprep.mubr.bf16.mxu0 0
    %242 = vmatmul.mubr.bf16.gmra.mxu0 %v207
    %v243 = vpop.f32.mrf.mxu0
    %v244 = vadd.f32 0.0, %v243
    %v245 = vpop.f32.mrf.mxu0
    %v246 = vpop.f32.mrf.mxu0
    %v247 = vadd.f32 0.0, %v246
    %v248 = vpop.f32.mrf.mxu0
    %249 = vdwg.mxu0
    %v252 = vunpack.c.l.b16 %v176
    %v253 = vunpack.c.l.b16 %v177
    %v254 = vpack.c.b16 %v253, %v252
    %v259 = vunpack.c.l.b16 %v178
    %v260 = vunpack.c.l.b16 %v179
    %v261 = vunpack.c.l.b16 %v180
    %v262 = vunpack.c.l.b16 %v181
    %v263 = vpack.c.b16 %v260, %v259
    %v264 = vpack.c.b16 %v262, %v261
    %v268 = vsel %vm205, %v254, 0
    %270 = vmatprep.subr.bf16.mxu0 0
    %271 = vmatpush1.bf16.msra.mxu0 0
    %272 = vmatprep.subr.bf16.mxu0 0
    %273 = vmatpush1.bf16.msra.mxu0 0
    %274 = vmatprep.subr.bf16.mxu0 0
    %275 = vmatpush1.bf16.msra.mxu0 0
    %276 = vmatprep.subr.bf16.mxu0 0
    %277 = vmatpush1.bf16.msra.mxu0 0
    %278 = vmatprep.subr.bf16.mxu0 0
    %279 = vmatpush1.bf16.msra.mxu0 0
    %280 = vmatprep.subr.bf16.mxu0 0
    %281 = vmatpush1.bf16.msra.mxu0 0
    %282 = vmatprep.subr.bf16.mxu0 0
    %283 = vmatpush1.bf16.msra.mxu0 %v264
    %284 = vmatprep.subr.bf16.mxu0 0
    %285 = vmatpush1.bf16.msra.mxu0 %v263
    %286 = vmatprep.subr.bf16.mxu0 0
    %287 = vmatpush2.bf16.msra.mxu0 0
    %288 = vmatprep.subr.bf16.mxu0 0
    %289 = vmatpush2.bf16.msra.mxu0 0
    %290 = vmatprep.subr.bf16.mxu0 0
    %291 = vmatpush2.bf16.msra.mxu0 0
    %292 = vmatprep.subr.bf16.mxu0 0
    %293 = vmatpush2.bf16.msra.mxu0 0
    %294 = vmatprep.subr.bf16.mxu0 0
    %295 = vmatpush2.bf16.msra.mxu0 0
    %296 = vmatprep.subr.bf16.mxu0 0
    %297 = vmatpush2.bf16.msra.mxu0 0
    %298 = vmatprep.subr.bf16.mxu0 0
    %299 = vmatpush2.bf16.msra.mxu0 0
    %300 = vmatprep.subr.bf16.mxu0 0
    %301 = vmatpush2.bf16.msra.mxu0 0
    %302 = vmatprep.mubr.bf16.mxu0 0
    %303 = vmatmul.mubr.bf16.gmra.mxu0 %v268
    %v304 = vpop.f32.mrf.mxu0
    %v305 = vadd.f32 %v244, %v304
    %v306 = vpop.f32.mrf.mxu0
    %v307 = vpop.f32.mrf.mxu0
    %v308 = vadd.f32 %v247, %v307
    %v309 = vpop.f32.mrf.mxu0
    %310 = vdwg.mxu0
    %v311 = vld [vmem:[#allocation10] sm:$0x1]
    %v313 = vlaneseq
    %v314 = vshrl.u32 %v313, 7
    %v315 = vsub.s32 0, %v314
    %v316 = vrot.slane %v311, %v315
    %v318 = vadd.f32 %v305, %v316
    %v319 = vadd.f32 %v308, %v316
    %v320 = vmax.f32 %v318, 0.0
    %v321 = vmax.f32 %v319, 0.0
    %v322 = vpack.c.bf16 %v321, %v320
    %v323 = vld [vmem:[#allocation11] sm:$0xf]
    %v324 = vld [vmem:[#allocation11 + $0x4] sm:$0xf]
    %v325 = vld [vmem:[#allocation11 + $0x8] sm:$0xf]
    %v326 = vld [vmem:[#allocation11 + $0xc] sm:$0xf]
    %v327 = vld [vmem:[#allocation13] sm:$0x1]
    %v329 = vlaneseq
    %v330 = vshrl.u32 %v329, 7
    %v331 = vsub.s32 0, %v330
    %v332 = vrot.slane %v327, %v331
    %v338 = vunpack.c.l.b16 %v323
    %v339 = vunpack.c.l.b16 %v324
    %v340 = vunpack.c.l.b16 %v325
    %v341 = vunpack.c.l.b16 %v326
    %v342 = vpack.c.b16 %v339, %v338
    %v343 = vpack.c.b16 %v341, %v340
    %v347 = vsel %vm205, %v322, 0
    %349 = vmatprep.subr.bf16.mxu0 0
    %350 = vmatpush1.bf16.msra.mxu0 0
    %351 = vmatprep.subr.bf16.mxu0 0
    %352 = vmatpush1.bf16.msra.mxu0 0
    %353 = vmatprep.subr.bf16.mxu0 0
    %354 = vmatpush1.bf16.msra.mxu0 0
    %355 = vmatprep.subr.bf16.mxu0 0
    %356 = vmatpush1.bf16.msra.mxu0 0
    %357 = vmatprep.subr.bf16.mxu0 0
    %358 = vmatpush1.bf16.msra.mxu0 0
    %359 = vmatprep.subr.bf16.mxu0 0
    %360 = vmatpush1.bf16.msra.mxu0 0
    %361 = vmatprep.subr.bf16.mxu0 0
    %362 = vmatpush1.bf16.msra.mxu0 %v343
    %363 = vmatprep.subr.bf16.mxu0 0
    %364 = vmatpush1.bf16.msra.mxu0 %v342
    %365 = vmatprep.subr.bf16.mxu0 0
    %366 = vmatpush2.bf16.msra.mxu0 0
    %367 = vmatprep.subr.bf16.mxu0 0
    %368 = vmatpush2.bf16.msra.mxu0 0
    %369 = vmatprep.subr.bf16.mxu0 0
    %370 = vmatpush2.bf16.msra.mxu0 0
    %371 = vmatprep.subr.bf16.mxu0 0
    %372 = vmatpush2.bf16.msra.mxu0 0
    %373 = vmatprep.subr.bf16.mxu0 0
    %374 = vmatpush2.bf16.msra.mxu0 0
    %375 = vmatprep.subr.bf16.mxu0 0
    %376 = vmatpush2.bf16.msra.mxu0 0
    %377 = vmatprep.subr.bf16.mxu0 0
    %378 = vmatpush2.bf16.msra.mxu0 0
    %379 = vmatprep.subr.bf16.mxu0 0
    %380 = vmatpush2.bf16.msra.mxu0 0
    %381 = vmatprep.mubr.bf16.mxu0 0
    %382 = vmatmul.mubr.bf16.gmra.mxu0 %v347
    %v383 = vpop.f32.mrf.mxu0
    %v384 = vadd.f32 %v332, %v383
    %v385 = vpop.f32.mrf.mxu0
    %v386 = vpop.f32.mrf.mxu0
    %v387 = vadd.f32 %v332, %v386
    %v388 = vpop.f32.mrf.mxu0
    %389 = vdwg.mxu0
    %v390 = vmax.f32 %v384, 0.0
    %v391 = vmax.f32 %v387, 0.0
    %v392 = vpack.c.bf16 %v391, %v390
    %v393 = vld [vmem:[#allocation14] sm:$0xf]
    %v394 = vld [vmem:[#allocation14 + $0x4] sm:$0xf]
    %v395 = vld [vmem:[#allocation14 + $0x8] sm:$0xf]
    %v396 = vld [vmem:[#allocation14 + $0xc] sm:$0xf]
    %v397 = vld [vmem:[#allocation16] sm:$0x1]
    %v399 = vlaneseq
    %v400 = vshrl.u32 %v399, 7
    %v401 = vsub.s32 0, %v400
    %v402 = vrot.slane %v397, %v401
    %v408 = vunpack.c.l.b16 %v393
    %v409 = vunpack.c.l.b16 %v394
    %v410 = vunpack.c.l.b16 %v395
    %v411 = vunpack.c.l.b16 %v396
    %v412 = vpack.c.b16 %v409, %v408
    %v413 = vpack.c.b16 %v411, %v410
    %v417 = vsel %vm205, %v392, 0
    %419 = vmatprep.subr.bf16.mxu0 0
    %420 = vmatpush1.bf16.msra.mxu0 0
    %421 = vmatprep.subr.bf16.mxu0 0
    %422 = vmatpush1.bf16.msra.mxu0 0
    %423 = vmatprep.subr.bf16.mxu0 0
    %424 = vmatpush1.bf16.msra.mxu0 0
    %425 = vmatprep.subr.bf16.mxu0 0
    %426 = vmatpush1.bf16.msra.mxu0 0
    %427 = vmatprep.subr.bf16.mxu0 0
    %428 = vmatpush1.bf16.msra.mxu0 0
    %429 = vmatprep.subr.bf16.mxu0 0
    %430 = vmatpush1.bf16.msra.mxu0 0
    %431 = vmatprep.subr.bf16.mxu0 0
    %432 = vmatpush1.bf16.msra.mxu0 %v413
    %433 = vmatprep.subr.bf16.mxu0 0
    %434 = vmatpush1.bf16.msra.mxu0 %v412
    %435 = vmatprep.subr.bf16.mxu0 0
    %436 = vmatpush2.bf16.msra.mxu0 0
    %437 = vmatprep.subr.bf16.mxu0 0
    %438 = vmatpush2.bf16.msra.mxu0 0
    %439 = vmatprep.subr.bf16.mxu0 0
    %440 = vmatpush2.bf16.msra.mxu0 0
    %441 = vmatprep.subr.bf16.mxu0 0
    %442 = vmatpush2.bf16.msra.mxu0 0
    %443 = vmatprep.subr.bf16.mxu0 0
    %444 = vmatpush2.bf16.msra.mxu0 0
    %445 = vmatprep.subr.bf16.mxu0 0
    %446 = vmatpush2.bf16.msra.mxu0 0
    %447 = vmatprep.subr.bf16.mxu0 0
    %448 = vmatpush2.bf16.msra.mxu0 0
    %449 = vmatprep.subr.bf16.mxu0 0
    %450 = vmatpush2.bf16.msra.mxu0 0
    %451 = vmatprep.mubr.bf16.mxu0 0
    %452 = vmatmul.mubr.bf16.gmra.mxu0 %v417
    %v453 = vpop.f32.mrf.mxu0
    %v454 = vadd.f32 %v402, %v453
    %v455 = vpop.f32.mrf.mxu0
    %v456 = vpop.f32.mrf.mxu0
    %v457 = vadd.f32 %v402, %v456
    %v458 = vpop.f32.mrf.mxu0
    %459 = vdwg.mxu0
    %v460 = vmax.f32 %v454, 0.0
    %v461 = vmax.f32 %v457, 0.0
    %v462 = vpack.c.bf16 %v461, %v460
    %v463 = vld [vmem:[%s9] sm:$0xf]
    %v464 = vld [vmem:[%s9 + $0x4] sm:$0xf]
    %v465 = vld [vmem:[%s9 + $0x8] sm:$0xf]
    %v466 = vld [vmem:[%s9 + $0xc] sm:$0xf]
    %v467 = vld [vmem:[%s10] sm:$0x1]
    %v469 = vlaneseq
    %v470 = vshrl.u32 %v469, 7
    %v471 = vsub.s32 0, %v470
    %v472 = vrot.slane %v467, %v471
    %v478 = vunpack.c.l.b16 %v463
    %v479 = vunpack.c.l.b16 %v464
    %v480 = vunpack.c.l.b16 %v465
    %v481 = vunpack.c.l.b16 %v466
    %v482 = vpack.c.b16 %v479, %v478
    %v483 = vpack.c.b16 %v481, %v480
    %v487 = vsel %vm205, %v462, 0
    %489 = vmatprep.subr.bf16.mxu0 0
    %490 = vmatpush1.bf16.msra.mxu0 0
    %491 = vmatprep.subr.bf16.mxu0 0
    %492 = vmatpush1.bf16.msra.mxu0 0
    %493 = vmatprep.subr.bf16.mxu0 0
    %494 = vmatpush1.bf16.msra.mxu0 0
    %495 = vmatprep.subr.bf16.mxu0 0
    %496 = vmatpush1.bf16.msra.mxu0 0
    %497 = vmatprep.subr.bf16.mxu0 0
    %498 = vmatpush1.bf16.msra.mxu0 0
    %499 = vmatprep.subr.bf16.mxu0 0
    %500 = vmatpush1.bf16.msra.mxu0 0
    %501 = vmatprep.subr.bf16.mxu0 0
    %502 = vmatpush1.bf16.msra.mxu0 %v483
    %503 = vmatprep.subr.bf16.mxu0 0
    %504 = vmatpush1.bf16.msra.mxu0 %v482
    %505 = vmatprep.subr.bf16.mxu0 0
    %506 = vmatpush2.bf16.msra.mxu0 0
    %507 = vmatprep.subr.bf16.mxu0 0
    %508 = vmatpush2.bf16.msra.mxu0 0
    %509 = vmatprep.subr.bf16.mxu0 0
    %510 = vmatpush2.bf16.msra.mxu0 0
    %511 = vmatprep.subr.bf16.mxu0 0
    %512 = vmatpush2.bf16.msra.mxu0 0
    %513 = vmatprep.subr.bf16.mxu0 0
    %514 = vmatpush2.bf16.msra.mxu0 0
    %515 = vmatprep.subr.bf16.mxu0 0
    %516 = vmatpush2.bf16.msra.mxu0 0
    %517 = vmatprep.subr.bf16.mxu0 0
    %518 = vmatpush2.bf16.msra.mxu0 0
    %519 = vmatprep.subr.bf16.mxu0 0
    %520 = vmatpush2.bf16.msra.mxu0 0
    %521 = vmatprep.mubr.bf16.mxu0 0
    %522 = vmatmul.mubr.bf16.gmra.mxu0 %v487
    %v523 = vpop.f32.mrf.mxu0
    %v524 = vadd.f32 %v472, %v523
    %v525 = vpop.f32.mrf.mxu0
    %v526 = vpop.f32.mrf.mxu0
    %v527 = vadd.f32 %v472, %v526
    %v528 = vpop.f32.mrf.mxu0
    %529 = vdwg.mxu0
    %v530 = vmax.f32 %v524, 0.0
    %v531 = vmax.f32 %v527, 0.0
    %v532 = vpack.c.bf16 %v531, %v530
    %v533 = vld [vmem:[#allocation17] sm:$0xf]
    %v534 = vld [vmem:[#allocation17 + $0x4] sm:$0xf]
    %v535 = vld [vmem:[#allocation17 + $0x8] sm:$0xf]
    %v536 = vld [vmem:[#allocation17 + $0xc] sm:$0xf]
    %v537 = vld [vmem:[%s12] sm:$0x1]
    %v539 = vlaneseq
    %v540 = vshrl.u32 %v539, 7
    %v541 = vsub.s32 0, %v540
    %v542 = vrot.slane %v537, %v541
    %v548 = vunpack.c.l.b16 %v533
    %v549 = vunpack.c.l.b16 %v534
    %v550 = vunpack.c.l.b16 %v535
    %v551 = vunpack.c.l.b16 %v536
    %v552 = vpack.c.b16 %v549, %v548
    %v553 = vpack.c.b16 %v551, %v550
    %v557 = vsel %vm205, %v532, 0
    %559 = vmatprep.subr.bf16.mxu0 0
    %560 = vmatpush1.bf16.msra.mxu0 0
    %561 = vmatprep.subr.bf16.mxu0 0
    %562 = vmatpush1.bf16.msra.mxu0 0
    %563 = vmatprep.subr.bf16.mxu0 0
    %564 = vmatpush1.bf16.msra.mxu0 0
    %565 = vmatprep.subr.bf16.mxu0 0
    %566 = vmatpush1.bf16.msra.mxu0 0
    %567 = vmatprep.subr.bf16.mxu0 0
    %568 = vmatpush1.bf16.msra.mxu0 0
    %569 = vmatprep.subr.bf16.mxu0 0
    %570 = vmatpush1.bf16.msra.mxu0 0
    %571 = vmatprep.subr.bf16.mxu0 0
    %572 = vmatpush1.bf16.msra.mxu0 %v553
    %573 = vmatprep.subr.bf16.mxu0 0
    %574 = vmatpush1.bf16.msra.mxu0 %v552
    %575 = vmatprep.subr.bf16.mxu0 0
    %576 = vmatpush2.bf16.msra.mxu0 0
    %577 = vmatprep.subr.bf16.mxu0 0
    %578 = vmatpush2.bf16.msra.mxu0 0
    %579 = vmatprep.subr.bf16.mxu0 0
    %580 = vmatpush2.bf16.msra.mxu0 0
    %581 = vmatprep.subr.bf16.mxu0 0
    %582 = vmatpush2.bf16.msra.mxu0 0
    %583 = vmatprep.subr.bf16.mxu0 0
    %584 = vmatpush2.bf16.msra.mxu0 0
    %585 = vmatprep.subr.bf16.mxu0 0
    %586 = vmatpush2.bf16.msra.mxu0 0
    %587 = vmatprep.subr.bf16.mxu0 0
    %588 = vmatpush2.bf16.msra.mxu0 0
    %589 = vmatprep.subr.bf16.mxu0 0
    %590 = vmatpush2.bf16.msra.mxu0 0
    %591 = vmatprep.mubr.bf16.mxu0 0
    %592 = vmatmul.mubr.bf16.gmra.mxu0 %v557
    %v593 = vpop.f32.mrf.mxu0
    %v594 = vadd.f32 %v542, %v593
    %v595 = vpop.f32.mrf.mxu0
    %v596 = vpop.f32.mrf.mxu0
    %v597 = vadd.f32 %v542, %v596
    %v598 = vpop.f32.mrf.mxu0
    %599 = vdwg.mxu0
    %v600 = vtanh.pop %v594
    %v601 = vtanh.pop %v597
    %602 = vst [vmem:[#allocation19] sm:$0xff] %v600
    %603 = vst [vmem:[#allocation19 + $0x8] sm:$0xff] %v601
    // Predicated region
    $region94: #{tpu_custom_call.1} parent=1 // pred_check
      _
    $region95: #{tpu_custom_call.1} parent=1 // pred_check_branch
      %605 = sbr.rel (0) target = $region97
    $region96: #{tpu_custom_call.1} parent=1 // pred_region
      %s607 = ssub.s32 256, 256
      %608 = vsyncadd [#allocation4], %s607
      %s609 = sshll.u32 [#allocation19], 4
      %s610 = int_to_ptr.vmem [resolvable:$true] %s609
      %615 = dma.vmem_to_hbm [thread:$0]  %s610, 256, %s13, [#allocation4], 128, 128, 8
    $region97: #{tpu_custom_call.1} parent=1 // pred_fallthru
      _
    // Predicated region
    $region98: #{tpu_custom_call.1} parent=1 // pred_check
      _
    $region99: #{tpu_custom_call.1} parent=1 // pred_check_branch
      %617 = sbr.rel (0) target = $region101
    $region100: #{tpu_custom_call.1} parent=1 // pred_region
      %618 = dma.done [#allocation4], 256
    $region101: #{tpu_custom_call.1} parent=1 // pred_fallthru
      _
    %619 = vsyncpa [#allocation3], 1
    %620 = vsyncpa [#allocation6], 1
    %621 = vsyncpa [#allocation9], 1
    %622 = vsyncpa [#allocation12], 1
    %623 = vsyncpa [#allocation15], 1
    %624 = vsyncpa [#allocation18], 1
    %625 = vsyncpa [#allocation4], 1

</llo_original>
